<compile_context>
chip_gen: v7x
topology: tpu7x:2x2x1
jax: 0.10.0
libtpu: 0.0.40
codegen_flags: <defaults>
</compile_context>

<pallas_src>
import math

import jax
import jax.numpy as jnp
from jax.experimental import pallas as pl
from jax.experimental.pallas import tpu as pltpu

OUT_DIM = 470
LANE = 128


def _round_up(x, m):
    return ((x + m - 1) // m) * m


def _choose_tiles(n, c, hw, itemsize, budget_bytes=8 * 1024 * 1024):
    """Pick (t_n, t_hw).

    Preference: keep the last (lane) dim at the FULL hw (contiguous DMA, no
    lane padding) and tile the batch in multiples of 8.  Only if a full-hw
    row block for 8 batch rows exceeds the budget do we tile hw in multiples
    of 128 (ragged tail masked in-kernel).
    """
    row_bytes = c * hw * itemsize          # one batch row at full hw
    t_n_cap = n if n <= 8 else (n // 8) * 8

    if 8 * row_bytes <= budget_bytes or hw <= LANE:
        if n <= 8:
            t_n = n
        else:
            t_n = max(8, (budget_bytes // max(1, row_bytes)) // 8 * 8)
        return min(t_n, t_n_cap), hw

    # hw is huge: tile the spatial axis in lane multiples.
    t_n = min(8, t_n_cap)
    t_hw = max(LANE, (budget_bytes // max(1, t_n * c * itemsize)) // LANE * LANE)
    if t_hw >= hw:
        t_hw = hw
    return t_n, t_hw


def _make_pool_kernel(hw, t_hw, inv_hw, mask_tail):
    """Streaming adaptive-avg-pool: accumulate spatial sums into the resident
    (t_n, C) pooled output block, scale once at the end of the spatial sweep."""

    def kernel(x_ref, pooled_ref):
        ki = pl.program_id(1)
        nk = pl.num_programs(1)

        @pl.when(ki == 0)
        def _():
            pooled_ref[...] = jnp.zeros_like(pooled_ref)

        xb = x_ref[...].astype(jnp.float32)      # bf16 inputs accumulate in f32
        if mask_tail:
            col = ki * t_hw + jax.lax.broadcasted_iota(jnp.int32, xb.shape, 2)
            xb = jnp.where(col < hw, xb, 0.0)
        pooled_ref[...] += jnp.sum(xb, axis=-1)  # XLU reduce, hides under DMA

        @pl.when(ki == nk - 1)
        def _():
            pooled_ref[...] *= inv_hw

    return kernel


def _make_mlp_kernel(eps, mxu_dtype):
    """Tiny fused MLP + batch-stats BatchNorm1d tail (single grid step)."""

    def kernel(pooled_ref, w1_ref, b1_ref, g_ref, be_ref, w2_ref, b2_ref,
               o_ref):
        pooled = pooled_ref[...]                                    # (N, C)
        h = jnp.dot(pooled.astype(mxu_dtype), w1_ref[...],
                    preferred_element_type=jnp.float32) + b1_ref[...]
        h = jnp.maximum(h, 0.0)                                     # (N, Hp)

        # BatchNorm1d, training mode: biased batch stats over the batch.
        mu = jnp.mean(h, axis=0, keepdims=True)
        var = jnp.mean((h - mu) ** 2, axis=0, keepdims=True)
        hn = (h - mu) * jax.lax.rsqrt(var + eps) * g_ref[...] + be_ref[...]

        o_ref[...] = (jnp.dot(hn.astype(mxu_dtype), w2_ref[...],
                              preferred_element_type=jnp.float32)
                      + b2_ref[...])

    return kernel


def relation_learner(x, params, *, mxu_dtype=jnp.float32,
                     tile_budget_bytes=8 * 1024 * 1024):
    """x: (N, C, H, W) float32/bfloat16  ->  (N, 470) float32.

    Note: mxu_dtype=jnp.bfloat16 rounds the (tiny) tail matmul operands; the
    strict 1e-4 allclose check below only holds for the default f32.
    """
    n, c, hgt, wid = x.shape
    hw = hgt * wid
    hidden = params["w1"].shape[1]

    # ---- Lane-dense zero padding of the small params (numerically exact) ---
    h_pad = _round_up(hidden, LANE)      # hidden (C//2) -> 128-lane multiple
    out_pad = _round_up(OUT_DIM, LANE)   # 470 -> 512

    w1 = (jnp.zeros((c, h_pad), jnp.float32)
          .at[:, :hidden].set(params["w1"]).astype(mxu_dtype))
    b1 = jnp.zeros((1, h_pad), jnp.float32).at[:, :hidden].set(params["b1"])
    gamma = jnp.ones((1, h_pad), jnp.float32).at[:, :hidden].set(params["gamma"])
    beta = jnp.zeros((1, h_pad), jnp.float32).at[:, :hidden].set(params["beta"])
    w2 = (jnp.zeros((h_pad, out_pad), jnp.float32)
          .at[:hidden, :OUT_DIM].set(params["w2"]).astype(mxu_dtype))
    b2 = jnp.zeros((1, out_pad), jnp.float32).at[:, :OUT_DIM].set(params["b2"])

    # ---- Kernel 1: streamed adaptive average pooling ----------------------
    x3 = x.reshape(n, c, hw)                       # free reshape, no padding
    itemsize = x.dtype.itemsize
    t_n, t_hw = _choose_tiles(n, c, hw, itemsize, tile_budget_bytes)
    nb = pl.cdiv(n, t_n)
    nk = pl.cdiv(hw, t_hw)
    mask_tail = (hw % t_hw) != 0

    tile_bytes = t_n * c * t_hw * itemsize
    pooled_blk_bytes = t_n * c * 4
    vmem_limit1 = int(min(44 << 20,
                          max(16 << 20,
                              2 * tile_bytes + 4 * pooled_blk_bytes
                              + (2 << 20))))

    pooled = pl.pallas_call(
        _make_pool_kernel(hw, t_hw, 1.0 / hw, mask_tail),
        out_shape=jax.ShapeDtypeStruct((n, c), jnp.float32),
        grid=(nb, nk),
        in_specs=[pl.BlockSpec((t_n, c, t_hw), lambda bi, ki: (bi, 0, ki))],
        out_specs=pl.BlockSpec((t_n, c), lambda bi, ki: (bi, 0)),
        compiler_params=pltpu.CompilerParams(
            # Batch blocks are independent -> megacore-parallel on v7x;
            # spatial axis is the accumulation sweep.
            dimension_semantics=("parallel", "arbitrary"),
            vmem_limit_bytes=vmem_limit1,
        ),
        cost_estimate=pl.CostEstimate(
            flops=int(n * c * hw + n * c),
            transcendentals=0,
            bytes_accessed=int(n * c * hw * itemsize + n * c * 4),
        ),
    )(x3)

    # ---- Kernel 2: tiny Linear -> ReLU -> BatchNorm1d -> Linear ------------
    # Everything here is small (N*C, C*h_pad, h_pad*512); run it in one step
    # with full VMEM blocks.  For extremely large N*C this tail should move
    # to plain XLA instead of growing the VMEM footprint.
    tail_bytes = 4 * (n * c + c * h_pad + 4 * h_pad + h_pad * out_pad
                      + out_pad + n * out_pad + 2 * n * h_pad)
    vmem_limit2 = int(min(48 << 20, max(16 << 20, 2 * tail_bytes)))

    out = pl.pallas_call(
        _make_mlp_kernel(1e-5, mxu_dtype),
        out_shape=jax.ShapeDtypeStruct((n, out_pad), jnp.float32),
        grid=(1,),
        in_specs=[
            pl.BlockSpec((n, c), lambda i: (0, 0)),          # pooled
            pl.BlockSpec((c, h_pad), lambda i: (0, 0)),      # w1
            pl.BlockSpec((1, h_pad), lambda i: (0, 0)),      # b1
            pl.BlockSpec((1, h_pad), lambda i: (0, 0)),      # gamma
            pl.BlockSpec((1, h_pad), lambda i: (0, 0)),      # beta
            pl.BlockSpec((h_pad, out_pad), lambda i: (0, 0)),  # w2
            pl.BlockSpec((1, out_pad), lambda i: (0, 0)),    # b2
        ],
        out_specs=pl.BlockSpec((n, out_pad), lambda i: (0, 0)),
        compiler_params=pltpu.CompilerParams(
            dimension_semantics=("arbitrary",),
            vmem_limit_bytes=vmem_limit2,
        ),
        cost_estimate=pl.CostEstimate(
            flops=int(2 * n * c * h_pad + 2 * n * h_pad * out_pad
                      + 10 * n * h_pad),
            transcendentals=int(h_pad),
            bytes_accessed=int(4 * (n * c + c * h_pad + 4 * h_pad
                                    + h_pad * out_pad + out_pad
                                    + n * out_pad)),
        ),
    )(pooled, w1, b1, gamma, beta, w2, b2)

    return out[:, :OUT_DIM]


def init_params(key, in_channels, out_dim=OUT_DIM):
    """Deterministic init mirroring nn.Linear / nn.BatchNorm1d defaults."""
    hidden = in_channels // 2
    k1, k2, k3, k4 = jax.random.split(key, 4)

    bound1 = 1.0 / math.sqrt(in_channels)
    w1 = jax.random.uniform(k1, (in_channels, hidden), jnp.float32,
                            -bound1, bound1)
    b1 = jax.random.uniform(k2, (1, hidden), jnp.float32, -bound1, bound1)

    bound2 = 1.0 / math.sqrt(hidden)
    w2 = jax.random.uniform(k3, (hidden, out_dim), jnp.float32,
                            -bound2, bound2)
    b2 = jax.random.uniform(k4, (1, out_dim), jnp.float32, -bound2, bound2)

    gamma = jnp.ones((1, hidden), jnp.float32)
    beta = jnp.zeros((1, hidden), jnp.float32)
    return {"w1": w1, "b1": b1, "gamma": gamma, "beta": beta,
            "w2": w2, "b2": b2}


def reference(x, params):
    """Pure-JAX reference for correctness check."""
    N, C, H, W = x.shape
    pooled = x.reshape(N, C, H * W).mean(axis=-1)
    h = pooled @ params["w1"] + params["b1"]
    h = jnp.maximum(h, 0.0)
    mu = h.mean(axis=0, keepdims=True)
    var = ((h - mu) ** 2).mean(axis=0, keepdims=True)
    h = (h - mu) * jax.lax.rsqrt(var + 1e-5) * params["gamma"] + params["beta"]
    return h @ params["w2"] + params["b2"]


if __name__ == "__main__":
    # Small shapes: batch=4, in_channels=32 (hidden=16), spatial=16x16.
    # (num_points / top_k are constructor-only args in the PyTorch module.)
    N, C, H, W = 4, 32, 16, 16

    key = jax.random.PRNGKey(0)
    kx, kp = jax.random.split(key)
    x = jax.random.normal(kx, (N, C, H, W), jnp.float32)
    params = init_params(kp, C)

    out = jax.block_until_ready(relation_learner(x, params))
    ref = reference(x, params)

    assert out.shape == (N, OUT_DIM), out.shape
    assert jnp.allclose(out, ref, atol=1e-4, rtol=1e-4), \
        float(jnp.max(jnp.abs(out - ref)))
    print("KERNEL_OK")
</pallas_src>

<mosaic_0001>
module attributes {stable_mosaic.version = 11 : i64} {
  func.func @kernel(%arg0: i32, %arg1: i32, %arg2: memref<4x32x256xf32, #tpu.memory_space<vmem>>, %arg3: memref<4x32xf32, #tpu.memory_space<vmem>>) attributes {dimension_semantics = [#tpu.dimension_semantics<parallel>, #tpu.dimension_semantics<arbitrary>], iteration_bounds = array<i64: 1, 1>, scalar_prefetch = 0 : i64, scratch_operands = 0 : i64, tpu.core_type = #tpu.core_type<tc>, window_params = [{transform_indices = @transform_0, window_bounds = array<i64: 4, 32, 256>}, {transform_indices = @transform_1, window_bounds = array<i64: 4, 32>}]} {
    %c0_i32 = arith.constant 0 : i32
    %0 = arith.cmpi eq, %arg1, %c0_i32 : i32
    %1 = arith.extui %0 : i1 to i32
    %c0_i32_0 = arith.constant 0 : i32
    %2 = arith.cmpi ne, %1, %c0_i32_0 : i32
    scf.if %2 {
      %cst_9 = arith.constant 0.000000e+00 : f32
      %11 = vector.broadcast %cst_9 : f32 to vector<4x32xf32>
      %c0_10 = arith.constant 0 : index
      %c0_11 = arith.constant 0 : index
      %12 = vector.load %arg3[%c0_10, %c0_11] : memref<4x32xf32, #tpu.memory_space<vmem>>, vector<4x32xf32>
      tpu.vector_store %arg3[%c0_10, %c0_11], %11 {strides = array<i32>} : memref<4x32xf32, #tpu.memory_space<vmem>>, vector<4x32xf32>,
    } else {
    }
    %c0 = arith.constant 0 : index
    %c0_1 = arith.constant 0 : index
    %c0_2 = arith.constant 0 : index
    %3 = vector.load %arg2[%c0, %c0_1, %c0_2] : memref<4x32x256xf32, #tpu.memory_space<vmem>>, vector<4x32x256xf32>
    %c0_3 = arith.constant 0 : index
    %c0_4 = arith.constant 0 : index
    %4 = vector.load %arg3[%c0_3, %c0_4] : memref<4x32xf32, #tpu.memory_space<vmem>>, vector<4x32xf32>
    %cst = arith.constant dense<0.000000e+00> : vector<4x32xf32>
    %5 = vector.multi_reduction <add>, %3, %cst [2] : vector<4x32x256xf32> to vector<4x32xf32>
    %6 = arith.addf %4, %5 : vector<4x32xf32>
    %c0_5 = arith.constant 0 : index
    %c0_6 = arith.constant 0 : index
    %7 = vector.load %arg3[%c0_5, %c0_6] : memref<4x32xf32, #tpu.memory_space<vmem>>, vector<4x32xf32>
    tpu.vector_store %arg3[%c0_5, %c0_6], %6 {strides = array<i32>} : memref<4x32xf32, #tpu.memory_space<vmem>>, vector<4x32xf32>,
    %c0_i32_7 = arith.constant 0 : i32
    %8 = arith.cmpi eq, %arg1, %c0_i32_7 : i32
    %9 = arith.extui %8 : i1 to i32
    %c0_i32_8 = arith.constant 0 : i32
    %10 = arith.cmpi ne, %9, %c0_i32_8 : i32
    scf.if %10 {
      %c0_9 = arith.constant 0 : index
      %c0_10 = arith.constant 0 : index
      %11 = vector.load %arg3[%c0_9, %c0_10] : memref<4x32xf32, #tpu.memory_space<vmem>>, vector<4x32xf32>
      %cst_11 = arith.constant 3.906250e-03 : f32
      %12 = vector.broadcast %cst_11 : f32 to vector<4x32xf32>
      %13 = arith.mulf %11, %12 : vector<4x32xf32>
      %c0_12 = arith.constant 0 : index
      %c0_13 = arith.constant 0 : index
      %14 = vector.load %arg3[%c0_12, %c0_13] : memref<4x32xf32, #tpu.memory_space<vmem>>, vector<4x32xf32>
      tpu.vector_store %arg3[%c0_12, %c0_13], %13 {strides = array<i32>} : memref<4x32xf32, #tpu.memory_space<vmem>>, vector<4x32xf32>,
    } else {
    }
    return
  }
  func.func @transform_0(%arg0: i32, %arg1: i32) -> (i32, i32, i32) {
    %c0_i32 = arith.constant 0 : i32
    %c0_i32_0 = arith.constant 0 : i32
    return %arg0, %c0_i32, %arg1 : i32, i32, i32
  }
  func.func @transform_1(%arg0: i32, %arg1: i32) -> (i32, i32) {
    %c0_i32 = arith.constant 0 : i32
    %c0_i32_0 = arith.constant 0 : i32
    return %arg0, %c0_i32 : i32, i32
  }
}

</mosaic_0001>

<llo_original>
// kernel: tpu_custom_call.1
$region0: #{tpu_custom_call.1}
  #allocation0 [shape = 'u32[]', space=smem, size = 0x4, offset = 0x4, fixed_abs, tag = 'smem constant byte address 0x4 - core index']
  #allocation1 [shape = 'u32[144,128]{1,0:T(1,128)}', space=vmem, size = 0x12000, scoped, tag = 'internal scratch']
  %s0 = inlined_call_operand.hbm [shape: f32[4,32,256], index: 0, kind: input, shape index: {}]
  %s1 = inlined_call_operand.hbm [shape: f32[4,32], index: 1, kind: output, shape index: {}]
  %s2 = sld [smem:[#allocation0]]
  $region26: #{tpu_custom_call.1} parent=0
    _
  %s4 = ssub.s32 1, %s2
  %s5 = scalar_select 0, %s4, %s2
  $region1: #{tpu_custom_call.1} parent=0
    #allocation2 [shape = 'u8[131072]{0}', space=vmem, size = 0x20000, scoped, tag = 'input window, operand 0, single buffered']
    #allocation3 [shape = 's32[1]{0}', space=sflag, size = 0x4, scoped, tag = 'scoped memory for tpu_custom_call.1']
    #allocation4 [shape = 's32[1]{0}', space=sflag, size = 0x4, scoped, tag = 'scoped memory for tpu_custom_call.1']
    #allocation5 [shape = 'u8[2048]{0}', space=vmem, size = 0x800, scoped, tag = 'output window, operand 0, single buffered']
    %6 = vsyncpa [#allocation3], 0
    %7 = vsyncpa [#allocation4], 0
    // Predicated region
    $region2: #{tpu_custom_call.1} parent=1 // pred_check
      _
    $region3: #{tpu_custom_call.1} parent=1 // pred_check_branch
      %9 = sbr.rel (0) target = $region5
    $region4: #{tpu_custom_call.1} parent=1 // pred_region
      %s11 = ssub.s32 4096, 4096
      %12 = vsyncadd [#allocation3], %s11
      %s13 = sshll.u32 [#allocation2], 4
      %s14 = int_to_ptr.vmem [resolvable:$true] %s13
      %19 = dma.hbm_to_vmem [thread:$0]  %s0, 4096, %s14, [#allocation3], 256, 256, 16
    $region5: #{tpu_custom_call.1} parent=1 // pred_fallthru
      _
    // Predicated region
    $region6: #{tpu_custom_call.1} parent=1 // pred_check
      _
    $region7: #{tpu_custom_call.1} parent=1 // pred_check_branch
      %21 = sbr.rel (0) target = $region9
    $region8: #{tpu_custom_call.1} parent=1 // pred_region
      %22 = dma.done [#allocation3], 4096
    $region9: #{tpu_custom_call.1} parent=1 // pred_fallthru
      _
    %p23 = scmp.eq.s32.totalorder 0, 0
    // Predicated region
    $region10: #{tpu_custom_call.1} parent=1 // pred_check
      %p24 = pneg %p23
    $region11: #{tpu_custom_call.1} parent=1 // pred_check_branch
      %26 = sbr.rel (%p24) target = $region13
    $region12: #{tpu_custom_call.1} parent=1 // pred_region
      %vm27 = vcmask 257024
      %28 = vst.msk [vmem:[#allocation5] sm:$0xf] %vm27, 0.0
    $region13: #{tpu_custom_call.1} parent=1 // pred_fallthru
      _
    %v29 = vld [vmem:[#allocation2] sm:$0xff]
    %v30 = vld [vmem:[#allocation2 + $0x8] sm:$0xff]
    %v31 = vld [vmem:[#allocation2 + $0x10] sm:$0xff]
    %v32 = vld [vmem:[#allocation2 + $0x18] sm:$0xff]
    %v33 = vld [vmem:[#allocation2 + $0x20] sm:$0xff]
    %v34 = vld [vmem:[#allocation2 + $0x28] sm:$0xff]
    %v35 = vld [vmem:[#allocation2 + $0x30] sm:$0xff]
    %v36 = vld [vmem:[#allocation2 + $0x38] sm:$0xff]
    %v37 = vld [vmem:[#allocation2 + $0x40] sm:$0xff]
    %v38 = vld [vmem:[#allocation2 + $0x48] sm:$0xff]
    %v39 = vld [vmem:[#allocation2 + $0x50] sm:$0xff]
    %v40 = vld [vmem:[#allocation2 + $0x58] sm:$0xff]
    %v41 = vld [vmem:[#allocation2 + $0x60] sm:$0xff]
    %v42 = vld [vmem:[#allocation2 + $0x68] sm:$0xff]
    %v43 = vld [vmem:[#allocation2 + $0x70] sm:$0xff]
    %v44 = vld [vmem:[#allocation2 + $0x78] sm:$0xff]
    %v45 = vld [vmem:[#allocation2 + $0x80] sm:$0xff]
    %v46 = vld [vmem:[#allocation2 + $0x88] sm:$0xff]
    %v47 = vld [vmem:[#allocation2 + $0x90] sm:$0xff]
    %v48 = vld [vmem:[#allocation2 + $0x98] sm:$0xff]
    %v49 = vld [vmem:[#allocation2 + $0xa0] sm:$0xff]
    %v50 = vld [vmem:[#allocation2 + $0xa8] sm:$0xff]
    %v51 = vld [vmem:[#allocation2 + $0xb0] sm:$0xff]
    %v52 = vld [vmem:[#allocation2 + $0xb8] sm:$0xff]
    %v53 = vld [vmem:[#allocation2 + $0xc0] sm:$0xff]
    %v54 = vld [vmem:[#allocation2 + $0xc8] sm:$0xff]
    %v55 = vld [vmem:[#allocation2 + $0xd0] sm:$0xff]
    %v56 = vld [vmem:[#allocation2 + $0xd8] sm:$0xff]
    %v57 = vld [vmem:[#allocation2 + $0xe0] sm:$0xff]
    %v58 = vld [vmem:[#allocation2 + $0xe8] sm:$0xff]
    %v59 = vld [vmem:[#allocation2 + $0xf0] sm:$0xff]
    %v60 = vld [vmem:[#allocation2 + $0xf8] sm:$0xff]
    %v61 = vld [vmem:[#allocation5] sm:$0xf]
    %v62 = vadd.f32 %v29, %v30
    %63 = vadd.xlane.f32.xlu0 %v62
    %v64 = vpop.xlane.xlu0 %63
    %v65 = vadd.f32 %v31, %v32
    %66 = vadd.xlane.f32.xlu0 %v65
    %v67 = vpop.xlane.xlu0 %66
    %v68 = vadd.f32 %v33, %v34
    %69 = vadd.xlane.f32.xlu0 %v68
    %v70 = vpop.xlane.xlu0 %69
    %v71 = vadd.f32 %v35, %v36
    %72 = vadd.xlane.f32.xlu0 %v71
    %v73 = vpop.xlane.xlu0 %72
    %v74 = vadd.f32 %v37, %v38
    %75 = vadd.xlane.f32.xlu0 %v74
    %v76 = vpop.xlane.xlu0 %75
    %v77 = vadd.f32 %v39, %v40
    %78 = vadd.xlane.f32.xlu0 %v77
    %v79 = vpop.xlane.xlu0 %78
    %v80 = vadd.f32 %v41, %v42
    %81 = vadd.xlane.f32.xlu0 %v80
    %v82 = vpop.xlane.xlu0 %81
    %v83 = vadd.f32 %v43, %v44
    %84 = vadd.xlane.f32.xlu0 %v83
    %v85 = vpop.xlane.xlu0 %84
    %v86 = vadd.f32 %v45, %v46
    %87 = vadd.xlane.f32.xlu0 %v86
    %v88 = vpop.xlane.xlu0 %87
    %v89 = vadd.f32 %v47, %v48
    %90 = vadd.xlane.f32.xlu0 %v89
    %v91 = vpop.xlane.xlu0 %90
    %v92 = vadd.f32 %v49, %v50
    %93 = vadd.xlane.f32.xlu0 %v92
    %v94 = vpop.xlane.xlu0 %93
    %v95 = vadd.f32 %v51, %v52
    %96 = vadd.xlane.f32.xlu0 %v95
    %v97 = vpop.xlane.xlu0 %96
    %v98 = vadd.f32 %v53, %v54
    %99 = vadd.xlane.f32.xlu0 %v98
    %v100 = vpop.xlane.xlu0 %99
    %v101 = vadd.f32 %v55, %v56
    %102 = vadd.xlane.f32.xlu0 %v101
    %v103 = vpop.xlane.xlu0 %102
    %v104 = vadd.f32 %v57, %v58
    %105 = vadd.xlane.f32.xlu0 %v104
    %v106 = vpop.xlane.xlu0 %105
    %v107 = vadd.f32 %v59, %v60
    %108 = vadd.xlane.f32.xlu0 %v107
    %v109 = vpop.xlane.xlu0 %108
    %v126 = vlaneseq
    %v127 = vand.u32 %v126, 127
    %v128 = vlaneseq
    %v129 = vshrl.u32 %v128, 7
    %v130 = vsub.s32 %v127, %v129
    %v131 = vrot.slane %v64, %v130
    %v132 = vadd.s32 %v127, 4294967288
    %v133 = vlaneseq
    %v134 = vshrl.u32 %v133, 7
    %v135 = vsub.s32 %v132, %v134
    %v136 = vrot.slane %v67, %v135
    %vm137 = vcmask 130112
    %v138 = vsel %vm137, %v136, %v131
    %v139 = vadd.s32 %v127, 4294967280
    %v140 = vlaneseq
    %v141 = vshrl.u32 %v140, 7
    %v142 = vsub.s32 %v139, %v141
    %v143 = vrot.slane %v70, %v142
    %vm144 = vcmask 195712
    %v145 = vsel %vm144, %v143, %v138
    %v146 = vadd.s32 %v127, 4294967272
    %v147 = vlaneseq
    %v148 = vshrl.u32 %v147, 7
    %v149 = vsub.s32 %v146, %v148
    %v150 = vrot.slane %v73, %v149
    %vm151 = vcmask 261312
    %v152 = vsel %vm151, %v150, %v145
    %v153 = vlaneseq
    %v154 = vshrl.u32 %v153, 7
    %v155 = vsub.s32 %v127, %v154
    %v156 = vrot.slane %v76, %v155
    %v157 = vlaneseq
    %v158 = vshrl.u32 %v157, 7
    %v159 = vsub.s32 %v132, %v158
    %v160 = vrot.slane %v79, %v159
    %v161 = vsel %vm137, %v160, %v156
    %v162 = vlaneseq
    %v163 = vshrl.u32 %v162, 7
    %v164 = vsub.s32 %v139, %v163
    %v165 = vrot.slane %v82, %v164
    %v166 = vsel %vm144, %v165, %v161
    %v167 = vlaneseq
    %v168 = vshrl.u32 %v167, 7
    %v169 = vsub.s32 %v146, %v168
    %v170 = vrot.slane %v85, %v169
    %v171 = vsel %vm151, %v170, %v166
    %v172 = vlaneseq
    %v173 = vshrl.u32 %v172, 7
    %v174 = vsub.s32 %v127, %v173
    %v175 = vrot.slane %v88, %v174
    %v176 = vlaneseq
    %v177 = vshrl.u32 %v176, 7
    %v178 = vsub.s32 %v132, %v177
    %v179 = vrot.slane %v91, %v178
    %v180 = vsel %vm137, %v179, %v175
    %v181 = vlaneseq
    %v182 = vshrl.u32 %v181, 7
    %v183 = vsub.s32 %v139, %v182
    %v184 = vrot.slane %v94, %v183
    %v185 = vsel %vm144, %v184, %v180
    %v186 = vlaneseq
    %v187 = vshrl.u32 %v186, 7
    %v188 = vsub.s32 %v146, %v187
    %v189 = vrot.slane %v97, %v188
    %v190 = vsel %vm151, %v189, %v185
    %v191 = vlaneseq
    %v192 = vshrl.u32 %v191, 7
    %v193 = vsub.s32 %v127, %v192
    %v194 = vrot.slane %v100, %v193
    %v195 = vlaneseq
    %v196 = vshrl.u32 %v195, 7
    %v197 = vsub.s32 %v132, %v196
    %v198 = vrot.slane %v103, %v197
    %v199 = vsel %vm137, %v198, %v194
    %v200 = vlaneseq
    %v201 = vshrl.u32 %v200, 7
    %v202 = vsub.s32 %v139, %v201
    %v203 = vrot.slane %v106, %v202
    %v204 = vsel %vm144, %v203, %v199
    %v205 = vlaneseq
    %v206 = vshrl.u32 %v205, 7
    %v207 = vsub.s32 %v146, %v206
    %v208 = vrot.slane %v109, %v207
    %v209 = vsel %vm151, %v208, %v204
    %vm210 = vcmask 1041409
    %v211 = vsel %vm210, %v171, %v152
    %vm212 = vcmask 1042434
    %v213 = vsel %vm212, %v190, %v211
    %vm214 = vcmask 1043459
    %v215 = vsel %vm214, %v209, %v213
    %v217 = vadd.f32 %v61, %v215
    %vm218 = vcmask 257024
    %219 = vst.msk [vmem:[#allocation5] sm:$0xf] %vm218, %v217
    // Predicated region
    $region14: #{tpu_custom_call.1} parent=1 // pred_check
      %p220 = pneg %p23
    $region15: #{tpu_custom_call.1} parent=1 // pred_check_branch
      %222 = sbr.rel (%p220) target = $region17
    $region16: #{tpu_custom_call.1} parent=1 // pred_region
      %v223 = vld [vmem:[#allocation5] sm:$0xf]
      %v224 = vmul.f32 %v223, 0.00390625
      %225 = vst.msk [vmem:[#allocation5] sm:$0xf] %vm218, %v224
    $region17: #{tpu_custom_call.1} parent=1 // pred_fallthru
      _
    // Predicated region
    $region18: #{tpu_custom_call.1} parent=1 // pred_check
      _
    $region19: #{tpu_custom_call.1} parent=1 // pred_check_branch
      %227 = sbr.rel (0) target = $region21
    $region20: #{tpu_custom_call.1} parent=1 // pred_region
      %s229 = ssub.s32 64, 64
      %230 = vsyncadd [#allocation4], %s229
      %s232 = sshll.u32 [#allocation5], 4
      %s233 = int_to_ptr.vmem [resolvable:$true] %s232
      %235 = dma.vmem_to_hbm [thread:$0]  %s233, 64, %s1, [#allocation4]
    $region21: #{tpu_custom_call.1} parent=1 // pred_fallthru
      _
    // Predicated region
    $region22: #{tpu_custom_call.1} parent=1 // pred_check
      _
    $region23: #{tpu_custom_call.1} parent=1 // pred_check_branch
      %237 = sbr.rel (0) target = $region25
    $region24: #{tpu_custom_call.1} parent=1 // pred_region
      %238 = dma.done [#allocation4], 64
    $region25: #{tpu_custom_call.1} parent=1 // pred_fallthru
      _
    %239 = vsyncpa [#allocation3], 1
    %240 = vsyncpa [#allocation4], 1

</llo_original>
